<compile_context>
chip_gen: v7x
topology: tpu7x:2x2x1
jax: 0.10.0
libtpu: 0.0.40
codegen_flags: <defaults>
</compile_context>

<pallas_src>
import jax
import jax.numpy as jnp
from jax.experimental import pallas as pl
from jax.experimental.pallas import tpu as pltpu

HEAD_N = 128  # lane-dense padding of the single-logit head


def _round_up(n, m):
    return ((n + m - 1) // m) * m


def sentiment_ann_kernel(x_ref, w1_ref, b1_ref, w2_ref, b2_ref, w3_ref, b3_ref, o_ref):
    # Layer 1: Linear with f32 MXU accumulation; bias + ReLU + bf16 downcast fused
    # into one elementwise expression (no standalone cast pass over (tm, 512)).
    h1 = jnp.dot(x_ref[...], w1_ref[...], preferred_element_type=jnp.float32)
    h1 = jnp.maximum(h1 + b1_ref[...], 0.0).astype(jnp.bfloat16)
    # Dropout(p=0.5) == identity in eval mode.

    # Layer 2: same pattern.
    h2 = jnp.dot(h1, w2_ref[...], preferred_element_type=jnp.float32)
    h2 = jnp.maximum(h2 + b2_ref[...], 0.0).astype(jnp.bfloat16)

    # Head Linear(prev_dim, 1): MXU matmul against a (h2_dim, HEAD_N) weight whose
    # column 0 is w3 (zeros elsewhere). Output block is lane-dense (tm, HEAD_N) f32
    # -> unmasked vector stores; wrapper takes [:, :1].
    o_ref[...] = jnp.dot(h2, w3_ref[...], preferred_element_type=jnp.float32) + b3_ref[...]


def _choose_tm(batch, per_row_bytes, resident_bytes, *, max_tm=4096, vmem_budget=24 << 20):
    """Batch tile: multiple of 16 (bf16 sublane tile), VMEM-budgeted, >=2 (even)
    tiles for large batches (v7x 2-core balance), minimal padding waste."""
    budget = max(vmem_budget - 2 * resident_bytes, 1 << 20)  # weights double-buffered
    tm_cap = max(16, min(max_tm, (budget // max(per_row_bytes, 1)) // 16 * 16))
    batch16 = _round_up(max(batch, 1), 16)
    if batch16 <= min(tm_cap, 512):
        return batch16  # tiny batch: one tile; splitting only adds per-step overhead
    n_tiles = max(2, -(-batch16 // tm_cap))
    if n_tiles % 2:
        n_tiles += 1  # even tile count balances the two v7x TensorCores
    return min(tm_cap, _round_up(-(-batch16 // n_tiles), 16))


def sentiment_ann_forward(x, params, *, max_tm=4096):
    """x: (batch, input_dim) bf16; params from init_params. Returns (batch, 1) f32."""
    w1, b1, w2, b2, w3_pad, b3_pad = params
    batch, in_dim = x.shape
    h1_dim = w1.shape[1]
    h2_dim = w2.shape[1]

    # Per-row VMEM: x (bf16, x2 buffers) + out (f32, x2 buffers) + f32 dot results +
    # bf16 activations + head f32 temp.
    per_row_bytes = (
        2 * in_dim * 2              # streamed x, double-buffered
        + 2 * HEAD_N * 4            # streamed out, double-buffered
        + (h1_dim + h2_dim) * 4     # f32 matmul results
        + (h1_dim + h2_dim) * 2     # bf16 activations
        + HEAD_N * 4                # head result temp
    )
    resident_bytes = sum(int(p.size) * p.dtype.itemsize for p in params)
    tm = min(_choose_tm(batch, per_row_bytes, resident_bytes, max_tm=max_tm), max_tm)

    padded = _round_up(batch, tm)
    if padded != batch:
        x = jnp.pad(x, ((0, padded - batch), (0, 0)))
    grid = (padded // tm,)

    def resident(arr):
        # Full-array block, constant index map -> pinned in VMEM across the grid.
        return pl.BlockSpec(arr.shape, lambda i: (0, 0))

    flops = 2 * padded * (in_dim * h1_dim + h1_dim * h2_dim + h2_dim * HEAD_N)
    bytes_accessed = (
        x.size * x.dtype.itemsize
        + resident_bytes
        + padded * HEAD_N * 4
    )

    out = pl.pallas_call(
        sentiment_ann_kernel,
        out_shape=jax.ShapeDtypeStruct((padded, HEAD_N), jnp.float32),
        grid=grid,
        in_specs=[
            pl.BlockSpec((tm, in_dim), lambda i: (i, 0)),  # x: streamed per batch tile
            resident(w1), resident(b1),
            resident(w2), resident(b2),
            resident(w3_pad), resident(b3_pad),
        ],
        out_specs=pl.BlockSpec((tm, HEAD_N), lambda i: (i, 0)),
        compiler_params=pltpu.CompilerParams(
            dimension_semantics=("parallel",),
            vmem_limit_bytes=32 << 20,
        ),
        cost_estimate=pl.CostEstimate(
            flops=flops, transcendentals=0, bytes_accessed=bytes_accessed
        ),
    )(x, w1, b1, w2, b2, w3_pad, b3_pad)
    return out[:batch, :1]


def init_params(key, input_dim, hidden_dims=(512, 256)):
    """PyTorch-style uniform(+/- 1/sqrt(fan_in)) init.

    Weights stored transposed vs PyTorch ((in, out)) in bf16; biases (1, out) f32.
    The output head is embedded in column 0 of a lane-dense (prev_dim, HEAD_N)
    bf16 matrix / (1, HEAD_N) f32 bias (zeros elsewhere) for the in-kernel MXU head.
    """
    params = []
    prev = input_dim
    for h in hidden_dims:
        key, kw, kb = jax.random.split(key, 3)
        bound = float(prev) ** -0.5
        w = jax.random.uniform(kw, (prev, h), jnp.float32, -bound, bound)
        b = jax.random.uniform(kb, (1, h), jnp.float32, -bound, bound)
        params += [w.astype(jnp.bfloat16), b]
        prev = h
    key, kw, kb = jax.random.split(key, 3)
    bound = float(prev) ** -0.5
    w3 = jax.random.uniform(kw, (prev, 1), jnp.float32, -bound, bound)
    b3 = jax.random.uniform(kb, (1, 1), jnp.float32, -bound, bound)
    w3_pad = jnp.zeros((prev, HEAD_N), jnp.float32).at[:, :1].set(w3).astype(jnp.bfloat16)
    b3_pad = jnp.zeros((1, HEAD_N), jnp.float32).at[:, :1].set(b3)
    params += [w3_pad, b3_pad]
    return params


def reference_forward(x, params):
    """Pure-JAX reference with exactly the kernel's bf16-weight / f32-accum math."""
    w1, b1, w2, b2, w3_pad, b3_pad = params
    h1 = jnp.maximum(
        jnp.dot(x, w1, preferred_element_type=jnp.float32) + b1, 0.0
    ).astype(jnp.bfloat16)
    h2 = jnp.maximum(
        jnp.dot(h1, w2, preferred_element_type=jnp.float32) + b2, 0.0
    ).astype(jnp.bfloat16)
    out = jnp.dot(h2, w3_pad, preferred_element_type=jnp.float32) + b3_pad
    return out[:, :1]


if __name__ == "__main__":
    key = jax.random.PRNGKey(0)
    batch, input_dim = 8, 128
    hidden_dims = (512, 256)

    k_x, k_p = jax.random.split(key)
    x = jax.random.normal(k_x, (batch, input_dim), jnp.float32).astype(jnp.bfloat16)
    params = init_params(k_p, input_dim, hidden_dims)

    out = jax.block_until_ready(sentiment_ann_forward(x, params))
    ref = reference_forward(x, params)

    assert out.shape == (batch, 1), out.shape
    assert jnp.allclose(out, ref, atol=2e-2, rtol=2e-2), "mismatch vs reference"

    print("KERNEL_OK")
</pallas_src>

<mosaic_0001>
module attributes {stable_mosaic.version = 11 : i64} {
  func.func @sentiment_ann_kernel(%arg0: i32, %arg1: memref<16x128xbf16, #tpu.memory_space<vmem>>, %arg2: memref<128x512xbf16, #tpu.memory_space<vmem>>, %arg3: memref<1x512xf32, #tpu.memory_space<vmem>>, %arg4: memref<512x256xbf16, #tpu.memory_space<vmem>>, %arg5: memref<1x256xf32, #tpu.memory_space<vmem>>, %arg6: memref<256x128xbf16, #tpu.memory_space<vmem>>, %arg7: memref<1x128xf32, #tpu.memory_space<vmem>>, %arg8: memref<16x128xf32, #tpu.memory_space<vmem>>) attributes {dimension_semantics = [#tpu.dimension_semantics<parallel>], iteration_bounds = array<i64: 1>, scalar_prefetch = 0 : i64, scratch_operands = 0 : i64, tpu.core_type = #tpu.core_type<tc>, window_params = [{transform_indices = @transform_0, window_bounds = array<i64: 16, 128>}, {pipeline_mode = #tpu.pipeline_mode<synchronous>, transform_indices = @transform_1, window_bounds = array<i64: 128, 512>}, {pipeline_mode = #tpu.pipeline_mode<synchronous>, transform_indices = @transform_2, window_bounds = array<i64: 1, 512>}, {pipeline_mode = #tpu.pipeline_mode<synchronous>, transform_indices = @transform_3, window_bounds = array<i64: 512, 256>}, {pipeline_mode = #tpu.pipeline_mode<synchronous>, transform_indices = @transform_4, window_bounds = array<i64: 1, 256>}, {pipeline_mode = #tpu.pipeline_mode<synchronous>, transform_indices = @transform_5, window_bounds = array<i64: 256, 128>}, {pipeline_mode = #tpu.pipeline_mode<synchronous>, transform_indices = @transform_6, window_bounds = array<i64: 1, 128>}, {transform_indices = @transform_7, window_bounds = array<i64: 16, 128>}]} {
    %c0 = arith.constant 0 : index
    %c0_0 = arith.constant 0 : index
    %0 = vector.load %arg1[%c0, %c0_0] : memref<16x128xbf16, #tpu.memory_space<vmem>>, vector<16x128xbf16>
    %c0_1 = arith.constant 0 : index
    %c0_2 = arith.constant 0 : index
    %1 = vector.load %arg2[%c0_1, %c0_2] : memref<128x512xbf16, #tpu.memory_space<vmem>>, vector<128x512xbf16>
    %cst = arith.constant dense<0.000000e+00> : vector<16x512xf32>
    %2 = tpu.matmul %0, %1, %cst {dimension_numbers = #tpu.dot_dimension_numbers<[1], [0], [0], [1], [0, 0, 1, 1], [], []>} : vector<16x128xbf16>, vector<128x512xbf16>, vector<16x512xf32> -> vector<16x512xf32>
    %c0_3 = arith.constant 0 : index
    %c0_4 = arith.constant 0 : index
    %3 = vector.load %arg3[%c0_3, %c0_4] : memref<1x512xf32, #tpu.memory_space<vmem>>, vector<1x512xf32>
    %4 = vector.broadcast %3 : vector<1x512xf32> to vector<16x512xf32>
    %5 = arith.addf %2, %4 : vector<16x512xf32>
    %cst_5 = arith.constant 0.000000e+00 : f32
    %6 = vector.broadcast %cst_5 : f32 to vector<16x512xf32>
    %7 = arith.maximumf %5, %6 : vector<16x512xf32>
    %8 = arith.truncf %7 : vector<16x512xf32> to vector<16x512xbf16>
    %c0_6 = arith.constant 0 : index
    %c0_7 = arith.constant 0 : index
    %9 = vector.load %arg4[%c0_6, %c0_7] : memref<512x256xbf16, #tpu.memory_space<vmem>>, vector<512x256xbf16>
    %cst_8 = arith.constant dense<0.000000e+00> : vector<16x256xf32>
    %10 = tpu.matmul %8, %9, %cst_8 {dimension_numbers = #tpu.dot_dimension_numbers<[1], [0], [0], [1], [0, 0, 1, 1], [], []>} : vector<16x512xbf16>, vector<512x256xbf16>, vector<16x256xf32> -> vector<16x256xf32>
    %c0_9 = arith.constant 0 : index
    %c0_10 = arith.constant 0 : index
    %11 = vector.load %arg5[%c0_9, %c0_10] : memref<1x256xf32, #tpu.memory_space<vmem>>, vector<1x256xf32>
    %12 = vector.broadcast %11 : vector<1x256xf32> to vector<16x256xf32>
    %13 = arith.addf %10, %12 : vector<16x256xf32>
    %cst_11 = arith.constant 0.000000e+00 : f32
    %14 = vector.broadcast %cst_11 : f32 to vector<16x256xf32>
    %15 = arith.maximumf %13, %14 : vector<16x256xf32>
    %16 = arith.truncf %15 : vector<16x256xf32> to vector<16x256xbf16>
    %c0_12 = arith.constant 0 : index
    %c0_13 = arith.constant 0 : index
    %17 = vector.load %arg6[%c0_12, %c0_13] : memref<256x128xbf16, #tpu.memory_space<vmem>>, vector<256x128xbf16>
    %cst_14 = arith.constant dense<0.000000e+00> : vector<16x128xf32>
    %18 = tpu.matmul %16, %17, %cst_14 {dimension_numbers = #tpu.dot_dimension_numbers<[1], [0], [0], [1], [0, 0, 1, 1], [], []>} : vector<16x256xbf16>, vector<256x128xbf16>, vector<16x128xf32> -> vector<16x128xf32>
    %c0_15 = arith.constant 0 : index
    %c0_16 = arith.constant 0 : index
    %19 = vector.load %arg7[%c0_15, %c0_16] : memref<1x128xf32, #tpu.memory_space<vmem>>, vector<1x128xf32>
    %20 = vector.broadcast %19 : vector<1x128xf32> to vector<16x128xf32>
    %21 = arith.addf %18, %20 : vector<16x128xf32>
    %c0_17 = arith.constant 0 : index
    %c0_18 = arith.constant 0 : index
    %22 = vector.load %arg8[%c0_17, %c0_18] : memref<16x128xf32, #tpu.memory_space<vmem>>, vector<16x128xf32>
    tpu.vector_store %arg8[%c0_17, %c0_18], %21 {strides = array<i32>} : memref<16x128xf32, #tpu.memory_space<vmem>>, vector<16x128xf32>,
    return
  }
  func.func @transform_0(%arg0: i32) -> (i32, i32) {
    %c0_i32 = arith.constant 0 : i32
    %c0_i32_0 = arith.constant 0 : i32
    return %arg0, %c0_i32 : i32, i32
  }
  func.func @transform_1(%arg0: i32) -> (i32, i32) {
    %c0_i32 = arith.constant 0 : i32
    %c0_i32_0 = arith.constant 0 : i32
    %c0_i32_1 = arith.constant 0 : i32
    return %c0_i32, %c0_i32_0 : i32, i32
  }
  func.func @transform_2(%arg0: i32) -> (i32, i32) {
    %c0_i32 = arith.constant 0 : i32
    %c0_i32_0 = arith.constant 0 : i32
    %c0_i32_1 = arith.constant 0 : i32
    return %c0_i32, %c0_i32_0 : i32, i32
  }
  func.func @transform_3(%arg0: i32) -> (i32, i32) {
    %c0_i32 = arith.constant 0 : i32
    %c0_i32_0 = arith.constant 0 : i32
    %c0_i32_1 = arith.constant 0 : i32
    return %c0_i32, %c0_i32_0 : i32, i32
  }
  func.func @transform_4(%arg0: i32) -> (i32, i32) {
    %c0_i32 = arith.constant 0 : i32
    %c0_i32_0 = arith.constant 0 : i32
    %c0_i32_1 = arith.constant 0 : i32
    return %c0_i32, %c0_i32_0 : i32, i32
  }
  func.func @transform_5(%arg0: i32) -> (i32, i32) {
    %c0_i32 = arith.constant 0 : i32
    %c0_i32_0 = arith.constant 0 : i32
    %c0_i32_1 = arith.constant 0 : i32
    return %c0_i32, %c0_i32_0 : i32, i32
  }
  func.func @transform_6(%arg0: i32) -> (i32, i32) {
    %c0_i32 = arith.constant 0 : i32
    %c0_i32_0 = arith.constant 0 : i32
    %c0_i32_1 = arith.constant 0 : i32
    return %c0_i32, %c0_i32_0 : i32, i32
  }
  func.func @transform_7(%arg0: i32) -> (i32, i32) {
    %c0_i32 = arith.constant 0 : i32
    %c0_i32_0 = arith.constant 0 : i32
    return %arg0, %c0_i32 : i32, i32
  }
}

</mosaic_0001>

<llo_original>
// kernel: tpu_custom_call.1
$region0: #{tpu_custom_call.1}
  #allocation0 [shape = 'u32[]', space=smem, size = 0x4, offset = 0x4, fixed_abs, tag = 'smem constant byte address 0x4 - core index']
  #allocation1 [shape = 'u32[144,128]{1,0:T(1,128)}', space=vmem, size = 0x12000, scoped, tag = 'internal scratch']
  %s0 = inlined_call_operand.hbm [shape: bf16[16,128], index: 0, kind: input, shape index: {}]
  %s1 = inlined_call_operand.hbm [shape: bf16[128,512], index: 1, kind: input, shape index: {}]
  %s2 = inlined_call_operand.vmem [shape: f32[1,512], index: 2, kind: input, shape index: {}]
  %s3 = inlined_call_operand.hbm [shape: bf16[512,256], index: 3, kind: input, shape index: {}]
  %s4 = inlined_call_operand.vmem [shape: f32[1,256], index: 4, kind: input, shape index: {}]
  %s5 = inlined_call_operand.hbm [shape: bf16[256,128], index: 5, kind: input, shape index: {}]
  %s6 = inlined_call_operand.vmem [shape: f32[1,128], index: 6, kind: input, shape index: {}]
  %s7 = inlined_call_operand.hbm [shape: f32[16,128], index: 7, kind: output, shape index: {}]
  %s8 = sld [smem:[#allocation0]]
  $region54: #{tpu_custom_call.1} parent=0
    _
  %s10 = ssub.s32 1, %s8
  %s11 = scalar_select 0, %s10, %s8
  $region1: #{tpu_custom_call.1} parent=0
    #allocation2 [shape = 'u8[4096]{0}', space=vmem, size = 0x1000, scoped, tag = 'input window, operand 0, single buffered']
    #allocation3 [shape = 's32[1]{0}', space=sflag, size = 0x4, scoped, tag = 'scoped memory for tpu_custom_call.1']
    #allocation4 [shape = 's32[1]{0}', space=sflag, size = 0x4, scoped, tag = 'scoped memory for tpu_custom_call.1']
    #allocation5 [shape = 'u8[131072]{0}', space=vmem, size = 0x20000, scoped, tag = 'input window, operand 1, single buffered']
    #allocation6 [shape = 's32[1]{0}', space=sflag, size = 0x4, scoped, tag = 'scoped memory for tpu_custom_call.1']
    #allocation7 [shape = 'u8[262144]{0}', space=vmem, size = 0x40000, scoped, tag = 'input window, operand 3, single buffered']
    #allocation8 [shape = 'u8[65536]{0}', space=vmem, size = 0x10000, scoped, tag = 'input window, operand 5, single buffered']
    #allocation9 [shape = 's32[1]{0}', space=sflag, size = 0x4, scoped, tag = 'scoped memory for tpu_custom_call.1']
    #allocation10 [shape = 'u8[8192]{0}', space=vmem, size = 0x2000, scoped, tag = 'output window, operand 0, single buffered']
    %12 = vsyncpa [#allocation3], 0
    %13 = vsyncpa [#allocation6], 0
    %14 = vsyncpa [#allocation9], 0
    %15 = vsyncpa [#allocation4], 0
    // Predicated region
    $region2: #{tpu_custom_call.1} parent=1 // pred_check
      _
    $region3: #{tpu_custom_call.1} parent=1 // pred_check_branch
      %17 = sbr.rel (0) target = $region5
    $region4: #{tpu_custom_call.1} parent=1 // pred_region
      %s19 = ssub.s32 128, 128
      %20 = vsyncadd [#allocation3], %s19
      %s21 = sshll.u32 [#allocation2], 4
      %s22 = int_to_ptr.vmem [resolvable:$true] %s21
      %27 = dma.hbm_to_vmem [thread:$0]  %s0, 128, %s22, [#allocation3], 64, 64, 4
    $region5: #{tpu_custom_call.1} parent=1 // pred_fallthru
      _
    // Predicated region
    $region6: #{tpu_custom_call.1} parent=1 // pred_check
      _
    $region7: #{tpu_custom_call.1} parent=1 // pred_check_branch
      %29 = sbr.rel (0) target = $region9
    $region8: #{tpu_custom_call.1} parent=1 // pred_region
      %s31 = ssub.s32 4096, 4096
      %32 = vsyncadd [#allocation6], %s31
      %s33 = sshll.u32 [#allocation5], 4
      %s34 = int_to_ptr.vmem [resolvable:$true] %s33
      %39 = dma.hbm_to_vmem [thread:$0]  %s1, 4096, %s34, [#allocation6], 256, 256, 16
    $region9: #{tpu_custom_call.1} parent=1 // pred_fallthru
      _
    // Predicated region
    $region10: #{tpu_custom_call.1} parent=1 // pred_check
      _
    $region11: #{tpu_custom_call.1} parent=1 // pred_check_branch
      %41 = sbr.rel (0) target = $region13
    $region12: #{tpu_custom_call.1} parent=1 // pred_region
      _
    $region13: #{tpu_custom_call.1} parent=1 // pred_fallthru
      _
    // Predicated region
    $region14: #{tpu_custom_call.1} parent=1 // pred_check
      _
    $region15: #{tpu_custom_call.1} parent=1 // pred_check_branch
      %43 = sbr.rel (0) target = $region17
    $region16: #{tpu_custom_call.1} parent=1 // pred_region
      %s45 = ssub.s32 8192, 8192
      %46 = vsyncadd [#allocation6], %s45
      %s47 = sshll.u32 [#allocation7], 4
      %s48 = int_to_ptr.vmem [resolvable:$true] %s47
      %53 = dma.hbm_to_vmem [thread:$0]  %s3, 8192, %s48, [#allocation6], 128, 128, 8
    $region17: #{tpu_custom_call.1} parent=1 // pred_fallthru
      _
    // Predicated region
    $region18: #{tpu_custom_call.1} parent=1 // pred_check
      _
    $region19: #{tpu_custom_call.1} parent=1 // pred_check_branch
      %55 = sbr.rel (0) target = $region21
    $region20: #{tpu_custom_call.1} parent=1 // pred_region
      _
    $region21: #{tpu_custom_call.1} parent=1 // pred_fallthru
      _
    // Predicated region
    $region22: #{tpu_custom_call.1} parent=1 // pred_check
      _
    $region23: #{tpu_custom_call.1} parent=1 // pred_check_branch
      %57 = sbr.rel (0) target = $region25
    $region24: #{tpu_custom_call.1} parent=1 // pred_region
      %s59 = ssub.s32 2048, 2048
      %60 = vsyncadd [#allocation9], %s59
      %s61 = sshll.u32 [#allocation8], 4
      %s62 = int_to_ptr.vmem [resolvable:$true] %s61
      %67 = dma.hbm_to_vmem [thread:$0]  %s5, 2048, %s62, [#allocation9], 64, 64, 4
    $region25: #{tpu_custom_call.1} parent=1 // pred_fallthru
      _
    // Predicated region
    $region26: #{tpu_custom_call.1} parent=1 // pred_check
      _
    $region27: #{tpu_custom_call.1} parent=1 // pred_check_branch
      %69 = sbr.rel (0) target = $region29
    $region28: #{tpu_custom_call.1} parent=1 // pred_region
      _
    $region29: #{tpu_custom_call.1} parent=1 // pred_fallthru
      _
    // Predicated region
    $region30: #{tpu_custom_call.1} parent=1 // pred_check
      _
    $region31: #{tpu_custom_call.1} parent=1 // pred_check_branch
      %71 = sbr.rel (0) target = $region33
    $region32: #{tpu_custom_call.1} parent=1 // pred_region
      %72 = dma.done [#allocation3], 128
    $region33: #{tpu_custom_call.1} parent=1 // pred_fallthru
      _
    // Predicated region
    $region34: #{tpu_custom_call.1} parent=1 // pred_check
      _
    $region35: #{tpu_custom_call.1} parent=1 // pred_check_branch
      %74 = sbr.rel (0) target = $region37
    $region36: #{tpu_custom_call.1} parent=1 // pred_region
      %75 = dma.done [#allocation6], 4096
    $region37: #{tpu_custom_call.1} parent=1 // pred_fallthru
      _
    // Predicated region
    $region38: #{tpu_custom_call.1} parent=1 // pred_check
      _
    $region39: #{tpu_custom_call.1} parent=1 // pred_check_branch
      %77 = sbr.rel (0) target = $region41
    $region40: #{tpu_custom_call.1} parent=1 // pred_region
      %78 = dma.done [#allocation6], 8192
    $region41: #{tpu_custom_call.1} parent=1 // pred_fallthru
      _
    // Predicated region
    $region42: #{tpu_custom_call.1} parent=1 // pred_check
      _
    $region43: #{tpu_custom_call.1} parent=1 // pred_check_branch
      %80 = sbr.rel (0) target = $region45
    $region44: #{tpu_custom_call.1} parent=1 // pred_region
      %81 = dma.done [#allocation9], 2048
    $region45: #{tpu_custom_call.1} parent=1 // pred_fallthru
      _
    %v83 = vld [vmem:[#allocation2] sm:$0xf]
    %v84 = vld [vmem:[#allocation2 + $0x4] sm:$0xf]
    %v85 = vld [vmem:[#allocation5] sm:$0xff]
    %v86 = vld [vmem:[#allocation5 + $0x8] sm:$0xff]
    %v87 = vld [vmem:[#allocation5 + $0x10] sm:$0xff]
    %v88 = vld [vmem:[#allocation5 + $0x18] sm:$0xff]
    %v89 = vld [vmem:[#allocation5 + $0x20] sm:$0xff]
    %v90 = vld [vmem:[#allocation5 + $0x28] sm:$0xff]
    %v91 = vld [vmem:[#allocation5 + $0x30] sm:$0xff]
    %v92 = vld [vmem:[#allocation5 + $0x38] sm:$0xff]
    %v93 = vld [vmem:[#allocation5 + $0x40] sm:$0xff]
    %v94 = vld [vmem:[#allocation5 + $0x48] sm:$0xff]
    %v95 = vld [vmem:[#allocation5 + $0x50] sm:$0xff]
    %v96 = vld [vmem:[#allocation5 + $0x58] sm:$0xff]
    %v97 = vld [vmem:[#allocation5 + $0x60] sm:$0xff]
    %v98 = vld [vmem:[#allocation5 + $0x68] sm:$0xff]
    %v99 = vld [vmem:[#allocation5 + $0x70] sm:$0xff]
    %v100 = vld [vmem:[#allocation5 + $0x78] sm:$0xff]
    %v101 = vld [vmem:[#allocation5 + $0x80] sm:$0xff]
    %v102 = vld [vmem:[#allocation5 + $0x88] sm:$0xff]
    %v103 = vld [vmem:[#allocation5 + $0x90] sm:$0xff]
    %v104 = vld [vmem:[#allocation5 + $0x98] sm:$0xff]
    %v105 = vld [vmem:[#allocation5 + $0xa0] sm:$0xff]
    %v106 = vld [vmem:[#allocation5 + $0xa8] sm:$0xff]
    %v107 = vld [vmem:[#allocation5 + $0xb0] sm:$0xff]
    %v108 = vld [vmem:[#allocation5 + $0xb8] sm:$0xff]
    %v109 = vld [vmem:[#allocation5 + $0xc0] sm:$0xff]
    %v110 = vld [vmem:[#allocation5 + $0xc8] sm:$0xff]
    %v111 = vld [vmem:[#allocation5 + $0xd0] sm:$0xff]
    %v112 = vld [vmem:[#allocation5 + $0xd8] sm:$0xff]
    %v113 = vld [vmem:[#allocation5 + $0xe0] sm:$0xff]
    %v114 = vld [vmem:[#allocation5 + $0xe8] sm:$0xff]
    %v115 = vld [vmem:[#allocation5 + $0xf0] sm:$0xff]
    %v116 = vld [vmem:[#allocation5 + $0xf8] sm:$0xff]
    %v117 = vld [vmem:[%s2] sm:$0xf]
    %v119 = vlaneseq
    %v120 = vshrl.u32 %v119, 7
    %v121 = vsub.s32 0, %v120
    %v122 = vrot.slane %v117, %v121
    %v123 = vlaneseq
    %v124 = vshrl.u32 %v123, 7
    %v125 = vsub.s32 1, %v124
    %v126 = vrot.slane %v117, %v125
    %v127 = vlaneseq
    %v128 = vshrl.u32 %v127, 7
    %v129 = vsub.s32 2, %v128
    %v130 = vrot.slane %v117, %v129
    %v131 = vlaneseq
    %v132 = vshrl.u32 %v131, 7
    %v133 = vsub.s32 3, %v132
    %v134 = vrot.slane %v117, %v133
    %v141 = vunpack.c.l.b16 %v83
    %v142 = vunpack.c.l.b16 %v84
    %v143 = vpack.c.b16 %v142, %v141
    %v177 = vunpack.c.l.b16 %v85
    %v178 = vunpack.c.h.b16 %v85
    %v179 = vunpack.c.l.b16 %v86
    %v180 = vunpack.c.h.b16 %v86
    %v181 = vunpack.c.l.b16 %v87
    %v182 = vunpack.c.h.b16 %v87
    %v183 = vunpack.c.l.b16 %v88
    %v184 = vunpack.c.h.b16 %v88
    %v185 = vunpack.c.l.b16 %v89
    %v186 = vunpack.c.h.b16 %v89
    %v187 = vunpack.c.l.b16 %v90
    %v188 = vunpack.c.h.b16 %v90
    %v189 = vunpack.c.l.b16 %v91
    %v190 = vunpack.c.h.b16 %v91
    %v191 = vunpack.c.l.b16 %v92
    %v192 = vunpack.c.h.b16 %v92
    %v193 = vunpack.c.l.b16 %v93
    %v194 = vunpack.c.h.b16 %v93
    %v195 = vunpack.c.l.b16 %v94
    %v196 = vunpack.c.h.b16 %v94
    %v197 = vunpack.c.l.b16 %v95
    %v198 = vunpack.c.h.b16 %v95
    %v199 = vunpack.c.l.b16 %v96
    %v200 = vunpack.c.h.b16 %v96
    %v201 = vunpack.c.l.b16 %v97
    %v202 = vunpack.c.h.b16 %v97
    %v203 = vunpack.c.l.b16 %v98
    %v204 = vunpack.c.h.b16 %v98
    %v205 = vunpack.c.l.b16 %v99
    %v206 = vunpack.c.h.b16 %v99
    %v207 = vunpack.c.l.b16 %v100
    %v208 = vunpack.c.h.b16 %v100
    %v209 = vunpack.c.l.b16 %v101
    %v210 = vunpack.c.h.b16 %v101
    %v211 = vunpack.c.l.b16 %v102
    %v212 = vunpack.c.h.b16 %v102
    %v213 = vunpack.c.l.b16 %v103
    %v214 = vunpack.c.h.b16 %v103
    %v215 = vunpack.c.l.b16 %v104
    %v216 = vunpack.c.h.b16 %v104
    %v217 = vunpack.c.l.b16 %v105
    %v218 = vunpack.c.h.b16 %v105
    %v219 = vunpack.c.l.b16 %v106
    %v220 = vunpack.c.h.b16 %v106
    %v221 = vunpack.c.l.b16 %v107
    %v222 = vunpack.c.h.b16 %v107
    %v223 = vunpack.c.l.b16 %v108
    %v224 = vunpack.c.h.b16 %v108
    %v225 = vunpack.c.l.b16 %v109
    %v226 = vunpack.c.h.b16 %v109
    %v227 = vunpack.c.l.b16 %v110
    %v228 = vunpack.c.h.b16 %v110
    %v229 = vunpack.c.l.b16 %v111
    %v230 = vunpack.c.h.b16 %v111
    %v231 = vunpack.c.l.b16 %v112
    %v232 = vunpack.c.h.b16 %v112
    %v233 = vunpack.c.l.b16 %v113
    %v234 = vunpack.c.h.b16 %v113
    %v235 = vunpack.c.l.b16 %v114
    %v236 = vunpack.c.h.b16 %v114
    %v237 = vunpack.c.l.b16 %v115
    %v238 = vunpack.c.h.b16 %v115
    %v239 = vunpack.c.l.b16 %v116
    %v240 = vunpack.c.h.b16 %v116
    %v241 = vpack.c.b16 %v181, %v177
    %v242 = vpack.c.b16 %v182, %v178
    %v243 = vpack.c.b16 %v183, %v179
    %v244 = vpack.c.b16 %v184, %v180
    %v245 = vpack.c.b16 %v189, %v185
    %v246 = vpack.c.b16 %v190, %v186
    %v247 = vpack.c.b16 %v191, %v187
    %v248 = vpack.c.b16 %v192, %v188
    %v249 = vpack.c.b16 %v197, %v193
    %v250 = vpack.c.b16 %v198, %v194
    %v251 = vpack.c.b16 %v199, %v195
    %v252 = vpack.c.b16 %v200, %v196
    %v253 = vpack.c.b16 %v205, %v201
    %v254 = vpack.c.b16 %v206, %v202
    %v255 = vpack.c.b16 %v207, %v203
    %v256 = vpack.c.b16 %v208, %v204
    %v257 = vpack.c.b16 %v213, %v209
    %v258 = vpack.c.b16 %v214, %v210
    %v259 = vpack.c.b16 %v215, %v211
    %v260 = vpack.c.b16 %v216, %v212
    %v261 = vpack.c.b16 %v221, %v217
    %v262 = vpack.c.b16 %v222, %v218
    %v263 = vpack.c.b16 %v223, %v219
    %v264 = vpack.c.b16 %v224, %v220
    %v265 = vpack.c.b16 %v229, %v225
    %v266 = vpack.c.b16 %v230, %v226
    %v267 = vpack.c.b16 %v231, %v227
    %v268 = vpack.c.b16 %v232, %v228
    %v269 = vpack.c.b16 %v237, %v233
    %v270 = vpack.c.b16 %v238, %v234
    %v271 = vpack.c.b16 %v239, %v235
    %v272 = vpack.c.b16 %v240, %v236
    %305 = vmatprep.subr.bf16.mxu0 %v242
    %306 = vmatpush1.bf16.msra.mxu0 %v241
    %307 = vmatprep.subr.bf16.mxu0 %v246
    %308 = vmatpush1.bf16.msra.mxu0 %v245
    %309 = vmatprep.subr.bf16.mxu0 %v250
    %310 = vmatpush1.bf16.msra.mxu0 %v249
    %311 = vmatprep.subr.bf16.mxu0 %v254
    %312 = vmatpush1.bf16.msra.mxu0 %v253
    %313 = vmatprep.subr.bf16.mxu0 %v258
    %314 = vmatpush1.bf16.msra.mxu0 %v257
    %315 = vmatprep.subr.bf16.mxu0 %v262
    %316 = vmatpush1.bf16.msra.mxu0 %v261
    %317 = vmatprep.subr.bf16.mxu0 %v266
    %318 = vmatpush1.bf16.msra.mxu0 %v265
    %319 = vmatprep.subr.bf16.mxu0 %v270
    %320 = vmatpush1.bf16.msra.mxu0 %v269
    %321 = vmatprep.subr.bf16.mxu0 0
    %322 = vmatpush1.bf16.msra.mxu0 0
    %323 = vmatprep.subr.bf16.mxu0 0
    %324 = vmatpush1.bf16.msra.mxu0 0
    %325 = vmatprep.subr.bf16.mxu0 0
    %326 = vmatpush1.bf16.msra.mxu0 0
    %327 = vmatprep.subr.bf16.mxu0 0
    %328 = vmatpush1.bf16.msra.mxu0 0
    %329 = vmatprep.subr.bf16.mxu0 0
    %330 = vmatpush1.bf16.msra.mxu0 0
    %331 = vmatprep.subr.bf16.mxu0 0
    %332 = vmatpush1.bf16.msra.mxu0 0
    %333 = vmatprep.subr.bf16.mxu0 0
    %334 = vmatpush1.bf16.msra.mxu0 0
    %335 = vmatprep.subr.bf16.mxu0 0
    %336 = vmatpush1.bf16.msra.mxu0 0
    %337 = vmatprep.mubr.bf16.mxu0 0
    %338 = vmatmul.mubr.bf16.gmra.mrb[0].mxu0 %v143
    %v339 = vpop.f32.mrb[0].mxu0
    %v340 = vadd.f32 %v122, %v339
    %v341 = vpop.f32.mrb[0].mxu0
    %v342 = vadd.f32 %v126, %v341
    %v343 = vpop.f32.mrb[0].mxu0
    %v344 = vadd.f32 %v122, %v343
    %v345 = vpop.f32.mrb[0].mxu0
    %v346 = vadd.f32 %v126, %v345
    %347 = vdwg.mxu0
    %348 = vmatprep.subr.bf16.mxu0 %v244
    %349 = vmatpush1.bf16.msra.mxu0 %v243
    %350 = vmatprep.subr.bf16.mxu0 %v248
    %351 = vmatpush1.bf16.msra.mxu0 %v247
    %352 = vmatprep.subr.bf16.mxu0 %v252
    %353 = vmatpush1.bf16.msra.mxu0 %v251
    %354 = vmatprep.subr.bf16.mxu0 %v256
    %355 = vmatpush1.bf16.msra.mxu0 %v255
    %356 = vmatprep.subr.bf16.mxu0 %v260
    %357 = vmatpush1.bf16.msra.mxu0 %v259
    %358 = vmatprep.subr.bf16.mxu0 %v264
    %359 = vmatpush1.bf16.msra.mxu0 %v263
    %360 = vmatprep.subr.bf16.mxu0 %v268
    %361 = vmatpush1.bf16.msra.mxu0 %v267
    %362 = vmatprep.subr.bf16.mxu0 %v272
    %363 = vmatpush1.bf16.msra.mxu0 %v271
    %364 = vmatprep.subr.bf16.mxu0 0
    %365 = vmatpush1.bf16.msra.mxu0 0
    %366 = vmatprep.subr.bf16.mxu0 0
    %367 = vmatpush1.bf16.msra.mxu0 0
    %368 = vmatprep.subr.bf16.mxu0 0
    %369 = vmatpush1.bf16.msra.mxu0 0
    %370 = vmatprep.subr.bf16.mxu0 0
    %371 = vmatpush1.bf16.msra.mxu0 0
    %372 = vmatprep.subr.bf16.mxu0 0
    %373 = vmatpush1.bf16.msra.mxu0 0
    %374 = vmatprep.subr.bf16.mxu0 0
    %375 = vmatpush1.bf16.msra.mxu0 0
    %376 = vmatprep.subr.bf16.mxu0 0
    %377 = vmatpush1.bf16.msra.mxu0 0
    %378 = vmatprep.subr.bf16.mxu0 0
    %379 = vmatpush1.bf16.msra.mxu0 0
    %380 = vmatprep.mubr.bf16.mxu0 0
    %381 = vmatmul.mubr.bf16.gmra.mrb[0].mxu0 %v143
    %v382 = vpop.f32.mrb[0].mxu0
    %v383 = vadd.f32 %v130, %v382
    %v384 = vpop.f32.mrb[0].mxu0
    %v385 = vadd.f32 %v134, %v384
    %v386 = vpop.f32.mrb[0].mxu0
    %v387 = vadd.f32 %v130, %v386
    %v388 = vpop.f32.mrb[0].mxu0
    %v389 = vadd.f32 %v134, %v388
    %390 = vdwg.mxu0
    %v391 = vmax.f32 %v340, 0.0
    %v392 = vmax.f32 %v342, 0.0
    %v393 = vmax.f32 %v383, 0.0
    %v394 = vmax.f32 %v385, 0.0
    %v395 = vmax.f32 %v344, 0.0
    %v396 = vmax.f32 %v346, 0.0
    %v397 = vmax.f32 %v387, 0.0
    %v398 = vmax.f32 %v389, 0.0
    %v399 = vpack.c.bf16 %v395, %v391
    %v400 = vpack.c.bf16 %v396, %v392
    %v401 = vpack.c.bf16 %v397, %v393
    %v402 = vpack.c.bf16 %v398, %v394
    %v403 = vld [vmem:[#allocation7] sm:$0xff]
    %v404 = vld [vmem:[#allocation7 + $0x8] sm:$0xff]
    %v405 = vld [vmem:[#allocation7 + $0x10] sm:$0xff]
    %v406 = vld [vmem:[#allocation7 + $0x18] sm:$0xff]
    %v407 = vld [vmem:[#allocation7 + $0x20] sm:$0xff]
    %v408 = vld [vmem:[#allocation7 + $0x28] sm:$0xff]
    %v409 = vld [vmem:[#allocation7 + $0x30] sm:$0xff]
    %v410 = vld [vmem:[#allocation7 + $0x38] sm:$0xff]
    %v411 = vld [vmem:[#allocation7 + $0x40] sm:$0xff]
    %v412 = vld [vmem:[#allocation7 + $0x48] sm:$0xff]
    %v413 = vld [vmem:[#allocation7 + $0x50] sm:$0xff]
    %v414 = vld [vmem:[#allocation7 + $0x58] sm:$0xff]
    %v415 = vld [vmem:[#allocation7 + $0x60] sm:$0xff]
    %v416 = vld [vmem:[#allocation7 + $0x68] sm:$0xff]
    %v417 = vld [vmem:[#allocation7 + $0x70] sm:$0xff]
    %v418 = vld [vmem:[#allocation7 + $0x78] sm:$0xff]
    %v419 = vld [vmem:[#allocation7 + $0x80] sm:$0xff]
    %v420 = vld [vmem:[#allocation7 + $0x88] sm:$0xff]
    %v421 = vld [vmem:[#allocation7 + $0x90] sm:$0xff]
    %v422 = vld [vmem:[#allocation7 + $0x98] sm:$0xff]
    %v423 = vld [vmem:[#allocation7 + $0xa0] sm:$0xff]
    %v424 = vld [vmem:[#allocation7 + $0xa8] sm:$0xff]
    %v425 = vld [vmem:[#allocation7 + $0xb0] sm:$0xff]
    %v426 = vld [vmem:[#allocation7 + $0xb8] sm:$0xff]
    %v427 = vld [vmem:[#allocation7 + $0xc0] sm:$0xff]
    %v428 = vld [vmem:[#allocation7 + $0xc8] sm:$0xff]
    %v429 = vld [vmem:[#allocation7 + $0xd0] sm:$0xff]
    %v430 = vld [vmem:[#allocation7 + $0xd8] sm:$0xff]
    %v431 = vld [vmem:[#allocation7 + $0xe0] sm:$0xff]
    %v432 = vld [vmem:[#allocation7 + $0xe8] sm:$0xff]
    %v433 = vld [vmem:[#allocation7 + $0xf0] sm:$0xff]
    %v434 = vld [vmem:[#allocation7 + $0xf8] sm:$0xff]
    %v435 = vld [vmem:[#allocation7 + $0x100] sm:$0xff]
    %v436 = vld [vmem:[#allocation7 + $0x108] sm:$0xff]
    %v437 = vld [vmem:[#allocation7 + $0x110] sm:$0xff]
    %v438 = vld [vmem:[#allocation7 + $0x118] sm:$0xff]
    %v439 = vld [vmem:[#allocation7 + $0x120] sm:$0xff]
    %v440 = vld [vmem:[#allocation7 + $0x128] sm:$0xff]
    %v441 = vld [vmem:[#allocation7 + $0x130] sm:$0xff]
    %v442 = vld [vmem:[#allocation7 + $0x138] sm:$0xff]
    %v443 = vld [vmem:[#allocation7 + $0x140] sm:$0xff]
    %v444 = vld [vmem:[#allocation7 + $0x148] sm:$0xff]
    %v445 = vld [vmem:[#allocation7 + $0x150] sm:$0xff]
    %v446 = vld [vmem:[#allocation7 + $0x158] sm:$0xff]
    %v447 = vld [vmem:[#allocation7 + $0x160] sm:$0xff]
    %v448 = vld [vmem:[#allocation7 + $0x168] sm:$0xff]
    %v449 = vld [vmem:[#allocation7 + $0x170] sm:$0xff]
    %v450 = vld [vmem:[#allocation7 + $0x178] sm:$0xff]
    %v451 = vld [vmem:[#allocation7 + $0x180] sm:$0xff]
    %v452 = vld [vmem:[#allocation7 + $0x188] sm:$0xff]
    %v453 = vld [vmem:[#allocation7 + $0x190] sm:$0xff]
    %v454 = vld [vmem:[#allocation7 + $0x198] sm:$0xff]
    %v455 = vld [vmem:[#allocation7 + $0x1a0] sm:$0xff]
    %v456 = vld [vmem:[#allocation7 + $0x1a8] sm:$0xff]
    %v457 = vld [vmem:[#allocation7 + $0x1b0] sm:$0xff]
    %v458 = vld [vmem:[#allocation7 + $0x1b8] sm:$0xff]
    %v459 = vld [vmem:[#allocation7 + $0x1c0] sm:$0xff]
    %v460 = vld [vmem:[#allocation7 + $0x1c8] sm:$0xff]
    %v461 = vld [vmem:[#allocation7 + $0x1d0] sm:$0xff]
    %v462 = vld [vmem:[#allocation7 + $0x1d8] sm:$0xff]
    %v463 = vld [vmem:[#allocation7 + $0x1e0] sm:$0xff]
    %v464 = vld [vmem:[#allocation7 + $0x1e8] sm:$0xff]
    %v465 = vld [vmem:[#allocation7 + $0x1f0] sm:$0xff]
    %v466 = vld [vmem:[#allocation7 + $0x1f8] sm:$0xff]
    %v467 = vld [vmem:[%s4] sm:$0x3]
    %v469 = vlaneseq
    %v470 = vshrl.u32 %v469, 7
    %v471 = vsub.s32 0, %v470
    %v472 = vrot.slane %v467, %v471
    %v473 = vlaneseq
    %v474 = vshrl.u32 %v473, 7
    %v475 = vsub.s32 1, %v474
    %v476 = vrot.slane %v467, %v475
    %v543 = vunpack.c.l.b16 %v403
    %v544 = vunpack.c.h.b16 %v403
    %v545 = vunpack.c.l.b16 %v404
    %v546 = vunpack.c.h.b16 %v404
    %v547 = vunpack.c.l.b16 %v405
    %v548 = vunpack.c.h.b16 %v405
    %v549 = vunpack.c.l.b16 %v406
    %v550 = vunpack.c.h.b16 %v406
    %v551 = vunpack.c.l.b16 %v407
    %v552 = vunpack.c.h.b16 %v407
    %v553 = vunpack.c.l.b16 %v408
    %v554 = vunpack.c.h.b16 %v408
    %v555 = vunpack.c.l.b16 %v409
    %v556 = vunpack.c.h.b16 %v409
    %v557 = vunpack.c.l.b16 %v410
    %v558 = vunpack.c.h.b16 %v410
    %v559 = vunpack.c.l.b16 %v411
    %v560 = vunpack.c.h.b16 %v411
    %v561 = vunpack.c.l.b16 %v412
    %v562 = vunpack.c.h.b16 %v412
    %v563 = vunpack.c.l.b16 %v413
    %v564 = vunpack.c.h.b16 %v413
    %v565 = vunpack.c.l.b16 %v414
    %v566 = vunpack.c.h.b16 %v414
    %v567 = vunpack.c.l.b16 %v415
    %v568 = vunpack.c.h.b16 %v415
    %v569 = vunpack.c.l.b16 %v416
    %v570 = vunpack.c.h.b16 %v416
    %v571 = vunpack.c.l.b16 %v417
    %v572 = vunpack.c.h.b16 %v417
    %v573 = vunpack.c.l.b16 %v418
    %v574 = vunpack.c.h.b16 %v418
    %v575 = vunpack.c.l.b16 %v419
    %v576 = vunpack.c.h.b16 %v419
    %v577 = vunpack.c.l.b16 %v420
    %v578 = vunpack.c.h.b16 %v420
    %v579 = vunpack.c.l.b16 %v421
    %v580 = vunpack.c.h.b16 %v421
    %v581 = vunpack.c.l.b16 %v422
    %v582 = vunpack.c.h.b16 %v422
    %v583 = vunpack.c.l.b16 %v423
    %v584 = vunpack.c.h.b16 %v423
    %v585 = vunpack.c.l.b16 %v424
    %v586 = vunpack.c.h.b16 %v424
    %v587 = vunpack.c.l.b16 %v425
    %v588 = vunpack.c.h.b16 %v425
    %v589 = vunpack.c.l.b16 %v426
    %v590 = vunpack.c.h.b16 %v426
    %v591 = vunpack.c.l.b16 %v427
    %v592 = vunpack.c.h.b16 %v427
    %v593 = vunpack.c.l.b16 %v428
    %v594 = vunpack.c.h.b16 %v428
    %v595 = vunpack.c.l.b16 %v429
    %v596 = vunpack.c.h.b16 %v429
    %v597 = vunpack.c.l.b16 %v430
    %v598 = vunpack.c.h.b16 %v430
    %v599 = vunpack.c.l.b16 %v431
    %v600 = vunpack.c.h.b16 %v431
    %v601 = vunpack.c.l.b16 %v432
    %v602 = vunpack.c.h.b16 %v432
    %v603 = vunpack.c.l.b16 %v433
    %v604 = vunpack.c.h.b16 %v433
    %v605 = vunpack.c.l.b16 %v434
    %v606 = vunpack.c.h.b16 %v434
    %v607 = vunpack.c.l.b16 %v435
    %v608 = vunpack.c.h.b16 %v435
    %v609 = vunpack.c.l.b16 %v436
    %v610 = vunpack.c.h.b16 %v436
    %v611 = vunpack.c.l.b16 %v437
    %v612 = vunpack.c.h.b16 %v437
    %v613 = vunpack.c.l.b16 %v438
    %v614 = vunpack.c.h.b16 %v438
    %v615 = vunpack.c.l.b16 %v439
    %v616 = vunpack.c.h.b16 %v439
    %v617 = vunpack.c.l.b16 %v440
    %v618 = vunpack.c.h.b16 %v440
    %v619 = vunpack.c.l.b16 %v441
    %v620 = vunpack.c.h.b16 %v441
    %v621 = vunpack.c.l.b16 %v442
    %v622 = vunpack.c.h.b16 %v442
    %v623 = vunpack.c.l.b16 %v443
    %v624 = vunpack.c.h.b16 %v443
    %v625 = vunpack.c.l.b16 %v444
    %v626 = vunpack.c.h.b16 %v444
    %v627 = vunpack.c.l.b16 %v445
    %v628 = vunpack.c.h.b16 %v445
    %v629 = vunpack.c.l.b16 %v446
    %v630 = vunpack.c.h.b16 %v446
    %v631 = vunpack.c.l.b16 %v447
    %v632 = vunpack.c.h.b16 %v447
    %v633 = vunpack.c.l.b16 %v448
    %v634 = vunpack.c.h.b16 %v448
    %v635 = vunpack.c.l.b16 %v449
    %v636 = vunpack.c.h.b16 %v449
    %v637 = vunpack.c.l.b16 %v450
    %v638 = vunpack.c.h.b16 %v450
    %v639 = vunpack.c.l.b16 %v451
    %v640 = vunpack.c.h.b16 %v451
    %v641 = vunpack.c.l.b16 %v452
    %v642 = vunpack.c.h.b16 %v452
    %v643 = vunpack.c.l.b16 %v453
    %v644 = vunpack.c.h.b16 %v453
    %v645 = vunpack.c.l.b16 %v454
    %v646 = vunpack.c.h.b16 %v454
    %v647 = vunpack.c.l.b16 %v455
    %v648 = vunpack.c.h.b16 %v455
    %v649 = vunpack.c.l.b16 %v456
    %v650 = vunpack.c.h.b16 %v456
    %v651 = vunpack.c.l.b16 %v457
    %v652 = vunpack.c.h.b16 %v457
    %v653 = vunpack.c.l.b16 %v458
    %v654 = vunpack.c.h.b16 %v458
    %v655 = vunpack.c.l.b16 %v459
    %v656 = vunpack.c.h.b16 %v459
    %v657 = vunpack.c.l.b16 %v460
    %v658 = vunpack.c.h.b16 %v460
    %v659 = vunpack.c.l.b16 %v461
    %v660 = vunpack.c.h.b16 %v461
    %v661 = vunpack.c.l.b16 %v462
    %v662 = vunpack.c.h.b16 %v462
    %v663 = vunpack.c.l.b16 %v463
    %v664 = vunpack.c.h.b16 %v463
    %v665 = vunpack.c.l.b16 %v464
    %v666 = vunpack.c.h.b16 %v464
    %v667 = vunpack.c.l.b16 %v465
    %v668 = vunpack.c.h.b16 %v465
    %v669 = vunpack.c.l.b16 %v466
    %v670 = vunpack.c.h.b16 %v466
    %v671 = vpack.c.b16 %v545, %v543
    %v672 = vpack.c.b16 %v546, %v544
    %v673 = vpack.c.b16 %v549, %v547
    %v674 = vpack.c.b16 %v550, %v548
    %v675 = vpack.c.b16 %v553, %v551
    %v676 = vpack.c.b16 %v554, %v552
    %v677 = vpack.c.b16 %v557, %v555
    %v678 = vpack.c.b16 %v558, %v556
    %v679 = vpack.c.b16 %v561, %v559
    %v680 = vpack.c.b16 %v562, %v560
    %v681 = vpack.c.b16 %v565, %v563
    %v682 = vpack.c.b16 %v566, %v564
    %v683 = vpack.c.b16 %v569, %v567
    %v684 = vpack.c.b16 %v570, %v568
    %v685 = vpack.c.b16 %v573, %v571
    %v686 = vpack.c.b16 %v574, %v572
    %v687 = vpack.c.b16 %v577, %v575
    %v688 = vpack.c.b16 %v578, %v576
    %v689 = vpack.c.b16 %v581, %v579
    %v690 = vpack.c.b16 %v582, %v580
    %v691 = vpack.c.b16 %v585, %v583
    %v692 = vpack.c.b16 %v586, %v584
    %v693 = vpack.c.b16 %v589, %v587
    %v694 = vpack.c.b16 %v590, %v588
    %v695 = vpack.c.b16 %v593, %v591
    %v696 = vpack.c.b16 %v594, %v592
    %v697 = vpack.c.b16 %v597, %v595
    %v698 = vpack.c.b16 %v598, %v596
    %v699 = vpack.c.b16 %v601, %v599
    %v700 = vpack.c.b16 %v602, %v600
    %v701 = vpack.c.b16 %v605, %v603
    %v702 = vpack.c.b16 %v606, %v604
    %v703 = vpack.c.b16 %v609, %v607
    %v704 = vpack.c.b16 %v610, %v608
    %v705 = vpack.c.b16 %v613, %v611
    %v706 = vpack.c.b16 %v614, %v612
    %v707 = vpack.c.b16 %v617, %v615
    %v708 = vpack.c.b16 %v618, %v616
    %v709 = vpack.c.b16 %v621, %v619
    %v710 = vpack.c.b16 %v622, %v620
    %v711 = vpack.c.b16 %v625, %v623
    %v712 = vpack.c.b16 %v626, %v624
    %v713 = vpack.c.b16 %v629, %v627
    %v714 = vpack.c.b16 %v630, %v628
    %v715 = vpack.c.b16 %v633, %v631
    %v716 = vpack.c.b16 %v634, %v632
    %v717 = vpack.c.b16 %v637, %v635
    %v718 = vpack.c.b16 %v638, %v636
    %v719 = vpack.c.b16 %v641, %v639
    %v720 = vpack.c.b16 %v642, %v640
    %v721 = vpack.c.b16 %v645, %v643
    %v722 = vpack.c.b16 %v646, %v644
    %v723 = vpack.c.b16 %v649, %v647
    %v724 = vpack.c.b16 %v650, %v648
    %v725 = vpack.c.b16 %v653, %v651
    %v726 = vpack.c.b16 %v654, %v652
    %v727 = vpack.c.b16 %v657, %v655
    %v728 = vpack.c.b16 %v658, %v656
    %v729 = vpack.c.b16 %v661, %v659
    %v730 = vpack.c.b16 %v662, %v660
    %v731 = vpack.c.b16 %v665, %v663
    %v732 = vpack.c.b16 %v666, %v664
    %v733 = vpack.c.b16 %v669, %v667
    %v734 = vpack.c.b16 %v670, %v668
    %799 = vmatprep.subr.bf16.mxu0 %v672
    %800 = vmatpush1.bf16.msra.mxu0 %v671
    %801 = vmatprep.subr.bf16.mxu0 %v674
    %802 = vmatpush1.bf16.msra.mxu0 %v673
    %803 = vmatprep.subr.bf16.mxu0 %v676
    %804 = vmatpush1.bf16.msra.mxu0 %v675
    %805 = vmatprep.subr.bf16.mxu0 %v678
    %806 = vmatpush1.bf16.msra.mxu0 %v677
    %807 = vmatprep.subr.bf16.mxu0 %v680
    %808 = vmatpush1.bf16.msra.mxu0 %v679
    %809 = vmatprep.subr.bf16.mxu0 %v682
    %810 = vmatpush1.bf16.msra.mxu0 %v681
    %811 = vmatprep.subr.bf16.mxu0 %v684
    %812 = vmatpush1.bf16.msra.mxu0 %v683
    %813 = vmatprep.subr.bf16.mxu0 %v686
    %814 = vmatpush1.bf16.msra.mxu0 %v685
    %815 = vmatprep.subr.bf16.mxu0 %v688
    %816 = vmatpush1.bf16.msra.mxu0 %v687
    %817 = vmatprep.subr.bf16.mxu0 %v690
    %818 = vmatpush1.bf16.msra.mxu0 %v689
    %819 = vmatprep.subr.bf16.mxu0 %v692
    %820 = vmatpush1.bf16.msra.mxu0 %v691
    %821 = vmatprep.subr.bf16.mxu0 %v694
    %822 = vmatpush1.bf16.msra.mxu0 %v693
    %823 = vmatprep.subr.bf16.mxu0 %v696
    %824 = vmatpush1.bf16.msra.mxu0 %v695
    %825 = vmatprep.subr.bf16.mxu0 %v698
    %826 = vmatpush1.bf16.msra.mxu0 %v697
    %827 = vmatprep.subr.bf16.mxu0 %v700
    %828 = vmatpush1.bf16.msra.mxu0 %v699
    %829 = vmatprep.subr.bf16.mxu0 %v702
    %830 = vmatpush1.bf16.msra.mxu0 %v701
    %831 = vmatprep.mubr.bf16.mxu0 %v400
    %832 = vmatmul.mubr.bf16.gmra.mrb[0].mxu0 %v399
    %v833 = vpop.f32.mrb[0].mxu0
    %v834 = vadd.f32 %v472, %v833
    %v835 = vpop.f32.mrb[0].mxu0
    %v836 = vadd.f32 %v476, %v835
    %v837 = vpop.f32.mrb[0].mxu0
    %v838 = vadd.f32 %v472, %v837
    %v839 = vpop.f32.mrb[0].mxu0
    %v840 = vadd.f32 %v476, %v839
    %841 = vdwg.mxu0
    %842 = vmatprep.subr.bf16.mxu0 %v704
    %843 = vmatpush1.bf16.msra.mxu0 %v703
    %844 = vmatprep.subr.bf16.mxu0 %v706
    %845 = vmatpush1.bf16.msra.mxu0 %v705
    %846 = vmatprep.subr.bf16.mxu0 %v708
    %847 = vmatpush1.bf16.msra.mxu0 %v707
    %848 = vmatprep.subr.bf16.mxu0 %v710
    %849 = vmatpush1.bf16.msra.mxu0 %v709
    %850 = vmatprep.subr.bf16.mxu0 %v712
    %851 = vmatpush1.bf16.msra.mxu0 %v711
    %852 = vmatprep.subr.bf16.mxu0 %v714
    %853 = vmatpush1.bf16.msra.mxu0 %v713
    %854 = vmatprep.subr.bf16.mxu0 %v716
    %855 = vmatpush1.bf16.msra.mxu0 %v715
    %856 = vmatprep.subr.bf16.mxu0 %v718
    %857 = vmatpush1.bf16.msra.mxu0 %v717
    %858 = vmatprep.subr.bf16.mxu0 %v720
    %859 = vmatpush1.bf16.msra.mxu0 %v719
    %860 = vmatprep.subr.bf16.mxu0 %v722
    %861 = vmatpush1.bf16.msra.mxu0 %v721
    %862 = vmatprep.subr.bf16.mxu0 %v724
    %863 = vmatpush1.bf16.msra.mxu0 %v723
    %864 = vmatprep.subr.bf16.mxu0 %v726
    %865 = vmatpush1.bf16.msra.mxu0 %v725
    %866 = vmatprep.subr.bf16.mxu0 %v728
    %867 = vmatpush1.bf16.msra.mxu0 %v727
    %868 = vmatprep.subr.bf16.mxu0 %v730
    %869 = vmatpush1.bf16.msra.mxu0 %v729
    %870 = vmatprep.subr.bf16.mxu0 %v732
    %871 = vmatpush1.bf16.msra.mxu0 %v731
    %872 = vmatprep.subr.bf16.mxu0 %v734
    %873 = vmatpush1.bf16.msra.mxu0 %v733
    %874 = vmatprep.mubr.bf16.mxu0 %v402
    %875 = vmatmul.mubr.bf16.gmra.mrb[0].mxu0 %v401
    %v876 = vpop.f32.mrb[0].mxu0
    %v877 = vadd.f32 %v834, %v876
    %v878 = vpop.f32.mrb[0].mxu0
    %v879 = vadd.f32 %v836, %v878
    %v880 = vpop.f32.mrb[0].mxu0
    %v881 = vadd.f32 %v838, %v880
    %v882 = vpop.f32.mrb[0].mxu0
    %v883 = vadd.f32 %v840, %v882
    %884 = vdwg.mxu0
    %v885 = vmax.f32 %v877, 0.0
    %v886 = vmax.f32 %v879, 0.0
    %v887 = vmax.f32 %v881, 0.0
    %v888 = vmax.f32 %v883, 0.0
    %v889 = vpack.c.bf16 %v887, %v885
    %v890 = vpack.c.bf16 %v888, %v886
    %v891 = vld [vmem:[#allocation8] sm:$0xf]
    %v892 = vld [vmem:[#allocation8 + $0x4] sm:$0xf]
    %v893 = vld [vmem:[#allocation8 + $0x8] sm:$0xf]
    %v894 = vld [vmem:[#allocation8 + $0xc] sm:$0xf]
    %v895 = vld [vmem:[#allocation8 + $0x10] sm:$0xf]
    %v896 = vld [vmem:[#allocation8 + $0x14] sm:$0xf]
    %v897 = vld [vmem:[#allocation8 + $0x18] sm:$0xf]
    %v898 = vld [vmem:[#allocation8 + $0x1c] sm:$0xf]
    %v899 = vld [vmem:[#allocation8 + $0x20] sm:$0xf]
    %v900 = vld [vmem:[#allocation8 + $0x24] sm:$0xf]
    %v901 = vld [vmem:[#allocation8 + $0x28] sm:$0xf]
    %v902 = vld [vmem:[#allocation8 + $0x2c] sm:$0xf]
    %v903 = vld [vmem:[#allocation8 + $0x30] sm:$0xf]
    %v904 = vld [vmem:[#allocation8 + $0x34] sm:$0xf]
    %v905 = vld [vmem:[#allocation8 + $0x38] sm:$0xf]
    %v906 = vld [vmem:[#allocation8 + $0x3c] sm:$0xf]
    %v907 = vld [vmem:[#allocation8 + $0x40] sm:$0xf]
    %v908 = vld [vmem:[#allocation8 + $0x44] sm:$0xf]
    %v909 = vld [vmem:[#allocation8 + $0x48] sm:$0xf]
    %v910 = vld [vmem:[#allocation8 + $0x4c] sm:$0xf]
    %v911 = vld [vmem:[#allocation8 + $0x50] sm:$0xf]
    %v912 = vld [vmem:[#allocation8 + $0x54] sm:$0xf]
    %v913 = vld [vmem:[#allocation8 + $0x58] sm:$0xf]
    %v914 = vld [vmem:[#allocation8 + $0x5c] sm:$0xf]
    %v915 = vld [vmem:[#allocation8 + $0x60] sm:$0xf]
    %v916 = vld [vmem:[#allocation8 + $0x64] sm:$0xf]
    %v917 = vld [vmem:[#allocation8 + $0x68] sm:$0xf]
    %v918 = vld [vmem:[#allocation8 + $0x6c] sm:$0xf]
    %v919 = vld [vmem:[#allocation8 + $0x70] sm:$0xf]
    %v920 = vld [vmem:[#allocation8 + $0x74] sm:$0xf]
    %v921 = vld [vmem:[#allocation8 + $0x78] sm:$0xf]
    %v922 = vld [vmem:[#allocation8 + $0x7c] sm:$0xf]
    %v923 = vld [vmem:[%s6] sm:$0x1]
    %v925 = vlaneseq
    %v926 = vshrl.u32 %v925, 7
    %v927 = vsub.s32 0, %v926
    %v928 = vrot.slane %v923, %v927
    %v962 = vunpack.c.l.b16 %v891
    %v963 = vunpack.c.l.b16 %v892
    %v964 = vunpack.c.l.b16 %v893
    %v965 = vunpack.c.l.b16 %v894
    %v966 = vunpack.c.l.b16 %v895
    %v967 = vunpack.c.l.b16 %v896
    %v968 = vunpack.c.l.b16 %v897
    %v969 = vunpack.c.l.b16 %v898
    %v970 = vunpack.c.l.b16 %v899
    %v971 = vunpack.c.l.b16 %v900
    %v972 = vunpack.c.l.b16 %v901
    %v973 = vunpack.c.l.b16 %v902
    %v974 = vunpack.c.l.b16 %v903
    %v975 = vunpack.c.l.b16 %v904
    %v976 = vunpack.c.l.b16 %v905
    %v977 = vunpack.c.l.b16 %v906
    %v978 = vunpack.c.l.b16 %v907
    %v979 = vunpack.c.l.b16 %v908
    %v980 = vunpack.c.l.b16 %v909
    %v981 = vunpack.c.l.b16 %v910
    %v982 = vunpack.c.l.b16 %v911
    %v983 = vunpack.c.l.b16 %v912
    %v984 = vunpack.c.l.b16 %v913
    %v985 = vunpack.c.l.b16 %v914
    %v986 = vunpack.c.l.b16 %v915
    %v987 = vunpack.c.l.b16 %v916
    %v988 = vunpack.c.l.b16 %v917
    %v989 = vunpack.c.l.b16 %v918
    %v990 = vunpack.c.l.b16 %v919
    %v991 = vunpack.c.l.b16 %v920
    %v992 = vunpack.c.l.b16 %v921
    %v993 = vunpack.c.l.b16 %v922
    %v994 = vpack.c.b16 %v963, %v962
    %v995 = vpack.c.b16 %v965, %v964
    %v996 = vpack.c.b16 %v967, %v966
    %v997 = vpack.c.b16 %v969, %v968
    %v998 = vpack.c.b16 %v971, %v970
    %v999 = vpack.c.b16 %v973, %v972
    %v1000 = vpack.c.b16 %v975, %v974
    %v1001 = vpack.c.b16 %v977, %v976
    %v1002 = vpack.c.b16 %v979, %v978
    %v1003 = vpack.c.b16 %v981, %v980
    %v1004 = vpack.c.b16 %v983, %v982
    %v1005 = vpack.c.b16 %v985, %v984
    %v1006 = vpack.c.b16 %v987, %v986
    %v1007 = vpack.c.b16 %v989, %v988
    %v1008 = vpack.c.b16 %v991, %v990
    %v1009 = vpack.c.b16 %v993, %v992
    %1026 = vmatprep.subr.bf16.mxu0 0
    %1027 = vmatpush1.bf16.msra.mxu0 %v994
    %1028 = vmatprep.subr.bf16.mxu0 0
    %1029 = vmatpush1.bf16.msra.mxu0 %v995
    %1030 = vmatprep.subr.bf16.mxu0 0
    %1031 = vmatpush1.bf16.msra.mxu0 %v996
    %1032 = vmatprep.subr.bf16.mxu0 0
    %1033 = vmatpush1.bf16.msra.mxu0 %v997
    %1034 = vmatprep.subr.bf16.mxu0 0
    %1035 = vmatpush1.bf16.msra.mxu0 %v998
    %1036 = vmatprep.subr.bf16.mxu0 0
    %1037 = vmatpush1.bf16.msra.mxu0 %v999
    %1038 = vmatprep.subr.bf16.mxu0 0
    %1039 = vmatpush1.bf16.msra.mxu0 %v1000
    %1040 = vmatprep.subr.bf16.mxu0 0
    %1041 = vmatpush1.bf16.msra.mxu0 %v1001
    %1042 = vmatprep.subr.bf16.mxu0 0
    %1043 = vmatpush1.bf16.msra.mxu0 %v1002
    %1044 = vmatprep.subr.bf16.mxu0 0
    %1045 = vmatpush1.bf16.msra.mxu0 %v1003
    %1046 = vmatprep.subr.bf16.mxu0 0
    %1047 = vmatpush1.bf16.msra.mxu0 %v1004
    %1048 = vmatprep.subr.bf16.mxu0 0
    %1049 = vmatpush1.bf16.msra.mxu0 %v1005
    %1050 = vmatprep.subr.bf16.mxu0 0
    %1051 = vmatpush1.bf16.msra.mxu0 %v1006
    %1052 = vmatprep.subr.bf16.mxu0 0
    %1053 = vmatpush1.bf16.msra.mxu0 %v1007
    %1054 = vmatprep.subr.bf16.mxu0 0
    %1055 = vmatpush1.bf16.msra.mxu0 %v1008
    %1056 = vmatprep.subr.bf16.mxu0 0
    %1057 = vmatpush1.bf16.msra.mxu0 %v1009
    %1058 = vmatprep.mubr.bf16.mxu0 %v890
    %1059 = vmatmul.mubr.bf16.gmra.mrb[0].mxu0 %v889
    %v1060 = vpop.f32.mrb[0].mxu0
    %v1061 = vadd.f32 %v928, %v1060
    %v1062 = vpop.f32.mrb[0].mxu0
    %v1063 = vpop.f32.mrb[0].mxu0
    %v1064 = vadd.f32 %v928, %v1063
    %v1065 = vpop.f32.mrb[0].mxu0
    %1066 = vdwg.mxu0
    %1067 = vst [vmem:[#allocation10] sm:$0xff] %v1061
    %1068 = vst [vmem:[#allocation10 + $0x8] sm:$0xff] %v1064
    // Predicated region
    $region46: #{tpu_custom_call.1} parent=1 // pred_check
      _
    $region47: #{tpu_custom_call.1} parent=1 // pred_check_branch
      %1070 = sbr.rel (0) target = $region49
    $region48: #{tpu_custom_call.1} parent=1 // pred_region
      %s1072 = ssub.s32 256, 256
      %1073 = vsyncadd [#allocation4], %s1072
      %s1074 = sshll.u32 [#allocation10], 4
      %s1075 = int_to_ptr.vmem [resolvable:$true] %s1074
      %1080 = dma.vmem_to_hbm [thread:$0]  %s1075, 256, %s7, [#allocation4], 128, 128, 8
    $region49: #{tpu_custom_call.1} parent=1 // pred_fallthru
      _
    // Predicated region
    $region50: #{tpu_custom_call.1} parent=1 // pred_check
      _
    $region51: #{tpu_custom_call.1} parent=1 // pred_check_branch
      %1082 = sbr.rel (0) target = $region53
    $region52: #{tpu_custom_call.1} parent=1 // pred_region
      %1083 = dma.done [#allocation4], 256
    $region53: #{tpu_custom_call.1} parent=1 // pred_fallthru
      _
    %1084 = vsyncpa [#allocation3], 1
    %1085 = vsyncpa [#allocation6], 1
    %1086 = vsyncpa [#allocation9], 1
    %1087 = vsyncpa [#allocation4], 1

</llo_original>
